<compile_context>
chip_gen: v6e
topology: v6e:2x2x1
jax: 0.10.0
libtpu: 0.0.40
codegen_flags: <defaults>
</compile_context>

<pallas_src>
import math

import jax
import jax.numpy as jnp
from jax import lax
from jax.experimental import pallas as pl
from jax.experimental.pallas import tpu as pltpu


# ----------------------------------------------------------------------------
# helpers
# ----------------------------------------------------------------------------
def _pick_tile(dim, target, mult=8):
    """Largest divisor of `dim` that is <= target and a multiple of `mult`.

    Returns `dim` itself when dim <= target.  Raises (instead of silently
    using the full dimension) when dim is large and has no aligned divisor,
    since that would blow up VMEM with a huge single tile.
    """
    if dim <= target:
        return dim
    t = (target // mult) * mult
    while t >= mult:
        if dim % t == 0:
            return t
        t -= mult
    if dim > 4096:
        raise ValueError(
            f"dimension {dim} has no divisor <= {target} that is a multiple "
            f"of {mult}; pad it (e.g. to a multiple of {mult}) before calling."
        )
    return dim


def _vmem_cap_bytes():
    """Usable VMEM budget for this generation (with headroom)."""
    try:
        cap = int(pltpu.get_tpu_info().vmem_capacity_bytes)
    except Exception:  # info query only; never masks kernel errors
        cap = 64 * 1024 * 1024  # conservative (v7x per-TC VMEM)
    return (cap * 3) // 4


def _vmem_limit(est_bytes):
    cap = _vmem_cap_bytes()
    return int(min(cap, max(est_bytes + 4 * 1024 * 1024, 16 * 1024 * 1024)))


# ----------------------------------------------------------------------------
# weight-stationary linear kernel:  out = x @ W + b   (row- and N-tiled)
# ----------------------------------------------------------------------------
def _linear_kernel(x_ref, w_ref, b_ref, o_ref):
    acc = jnp.dot(x_ref[...], w_ref[...], preferred_element_type=jnp.float32)
    o_ref[...] = (acc + b_ref[...]).astype(o_ref.dtype)


def _linear(x2d, w, b2, out_dtype):
    """x2d: (M, K) bf16; w: (K, N) bf16; b2: (1, N) f32 -> (M, N) out_dtype."""
    M, K = x2d.shape
    N = w.shape[1]
    tm = _pick_tile(M, 512, 8)        # larger row tiles: fewer steps, bigger DMAs
    tn = _pick_tile(N, 1024, 128)     # N-tiling bounds weight residency (v7x 64 MiB)
    grid = (M // tm, N // tn)
    # TODO(synk): add K-tiling with an f32 accumulator for very large K (C >~ 8k).

    out_isize = jnp.dtype(out_dtype).itemsize
    est_bytes = (2 * tm * K * x2d.dtype.itemsize       # x tiles (double buffered)
                 + 2 * tm * tn * out_isize             # out tiles (double buffered)
                 + 2 * (K * tn * w.dtype.itemsize + tn * 4)  # weight/bias stripes
                 + tm * tn * 4)                        # f32 accumulator in flight
    params = pltpu.CompilerParams(
        dimension_semantics=("parallel", "parallel"),
        vmem_limit_bytes=_vmem_limit(est_bytes))
    cost = pl.CostEstimate(
        flops=2 * M * K * N,
        transcendentals=0,
        bytes_accessed=(M * K * x2d.dtype.itemsize + K * N * w.dtype.itemsize
                        + N * 4 + M * N * out_isize))

    return pl.pallas_call(
        _linear_kernel,
        out_shape=jax.ShapeDtypeStruct((M, N), out_dtype),
        grid_spec=pltpu.PrefetchScalarGridSpec(
            num_scalar_prefetch=0,
            grid=grid,
            in_specs=[
                pl.BlockSpec((tm, K), lambda i, j: (i, 0)),   # x row stripe
                pl.BlockSpec((K, tn), lambda i, j: (0, j)),   # weight N stripe
                pl.BlockSpec((1, tn), lambda i, j: (0, j)),   # bias N stripe
            ],
            out_specs=pl.BlockSpec((tm, tn), lambda i, j: (i, j)),
        ),
        compiler_params=params,
        cost_estimate=cost,
    )(x2d, w, b2)


# ----------------------------------------------------------------------------
# flash attention kernel (causal, online softmax)
# ----------------------------------------------------------------------------
def _flash_kernel(q_ref, k_ref, v_ref, o_ref, q_sc, m_sc, l_sc, acc_sc):
    block_q = q_ref.shape[1]
    block_k = k_ref.shape[1]
    hd = q_ref.shape[2]
    scale = 1.0 / math.sqrt(hd)

    qi = pl.program_id(1)
    ki = pl.program_id(2)
    q_start = qi * block_q
    k_start = ki * block_k

    @pl.when(ki == 0)
    def _init():
        # Hoisted: scale + bf16 cast of q happens once per q tile, not per kv step.
        q_sc[...] = (q_ref[0].astype(jnp.float32) * scale).astype(jnp.bfloat16)
        m_sc[...] = jnp.full(m_sc.shape, -jnp.inf, dtype=jnp.float32)
        l_sc[...] = jnp.zeros(l_sc.shape, dtype=jnp.float32)
        acc_sc[...] = jnp.zeros(acc_sc.shape, dtype=jnp.float32)

    def _scores():
        # QK^T contracting last dims of both operands -> no XLU transpose of K.
        return lax.dot_general(q_sc[...], k_ref[0], (((1,), (1,)), ((), ())),
                               preferred_element_type=jnp.float32)  # (bq, bk) f32

    def _update(s):
        m_prev = m_sc[...]                                           # (bq, 1)
        m_new = jnp.maximum(m_prev, jnp.max(s, axis=-1, keepdims=True))
        alpha = jnp.exp(m_prev - m_new)
        p = jnp.exp(s - m_new)                                       # (bq, bk) f32
        l_sc[...] = alpha * l_sc[...] + jnp.sum(p, axis=-1, keepdims=True)
        acc_sc[...] = alpha * acc_sc[...] + jnp.dot(
            p.astype(jnp.bfloat16), v_ref[0], preferred_element_type=jnp.float32)
        m_sc[...] = m_new

    # Tile classification (scalar, traced):
    #   needs_compute: tile intersects the lower triangle at all.
    #   straddles:     some (row, col) in the tile could violate causality.
    needs_compute = k_start <= q_start + (block_q - 1)
    straddles = (k_start + (block_k - 1)) > q_start

    @pl.when(needs_compute & jnp.logical_not(straddles))
    def _unmasked():
        # Fully below the diagonal: no iota/compare/select work at all.
        _update(_scores())

    @pl.when(needs_compute & straddles)
    def _masked():
        s = _scores()
        row = q_start + lax.broadcasted_iota(jnp.int32, s.shape, 0)
        col = k_start + lax.broadcasted_iota(jnp.int32, s.shape, 1)
        _update(jnp.where(col <= row, s, -jnp.inf))

    @pl.when(ki == pl.num_programs(2) - 1)
    def _finalize():
        # approx reciprocal goes to the EUP slot; error ~2^-12 (inference-grade).
        inv_l = pl.reciprocal(l_sc[...], approx=True)
        o_ref[0] = (acc_sc[...] * inv_l).astype(o_ref.dtype)


def _flash_attention(q, k, v):
    """q, k, v: (B*H, T, hd) bf16 -> (B*H, T, hd) bf16, causal."""
    BH, T, hd = q.shape
    # Tile targets: working set at these sizes is only a few MiB, so the same
    # targets are fine on v5e/v6e (128 MiB VMEM) and v7x (64 MiB).
    block_q = _pick_tile(T, 512, 8)
    block_k = _pick_tile(T, 512, 8)
    nq, nk = T // block_q, T // block_k

    def q_index_map(b, i, j):
        return (b, i, 0)

    def kv_index_map(b, i, j):
        # Clamp to the last causally-needed kv block for this q tile: when the
        # block index repeats, Pallas skips the DMA, so tiles above the
        # diagonal cost neither FLOPs (pl.when) nor HBM bandwidth.
        last_needed = (i * block_q + block_q - 1) // block_k
        return (b, jnp.minimum(j, last_needed), 0)

    est_bytes = (2 * block_q * hd * 2                   # q tiles, 2 buffers, bf16
                 + 2 * 2 * block_k * hd * 2             # k, v tiles, 2 buffers, bf16
                 + 2 * block_q * hd * 2                 # out tiles, 2 buffers, bf16
                 + block_q * hd * 2                     # q scratch (bf16)
                 + 2 * block_q * 4 + block_q * hd * 4   # m, l, acc scratch (f32)
                 + 4 * block_q * block_k * 4)           # in-flight (bq, bk) f32 tiles
    params = pltpu.CompilerParams(
        dimension_semantics=("parallel", "parallel", "arbitrary"),
        vmem_limit_bytes=_vmem_limit(est_bytes))
    cost = pl.CostEstimate(
        flops=2 * BH * T * T * hd,           # ~half of dense 4*T^2*hd (causal)
        transcendentals=BH * T * T // 2,
        bytes_accessed=BH * T * hd * 2 * (2 + nq))

    return pl.pallas_call(
        _flash_kernel,
        out_shape=jax.ShapeDtypeStruct((BH, T, hd), jnp.bfloat16),
        grid_spec=pltpu.PrefetchScalarGridSpec(
            num_scalar_prefetch=0,
            grid=(BH, nq, nk),
            in_specs=[
                pl.BlockSpec((1, block_q, hd), q_index_map),
                pl.BlockSpec((1, block_k, hd), kv_index_map),
                pl.BlockSpec((1, block_k, hd), kv_index_map),
            ],
            out_specs=pl.BlockSpec((1, block_q, hd), q_index_map),
            scratch_shapes=[
                pltpu.VMEM((block_q, hd), jnp.bfloat16),   # pre-scaled q
                pltpu.VMEM((block_q, 1), jnp.float32),     # running max  m
                pltpu.VMEM((block_q, 1), jnp.float32),     # running sum  l
                pltpu.VMEM((block_q, hd), jnp.float32),    # output accumulator
            ],
        ),
        compiler_params=params,
        cost_estimate=cost,
    )(q, k, v)


# ----------------------------------------------------------------------------
# full module forward
# ----------------------------------------------------------------------------
def causal_self_attention(x, w_qkv, b_qkv, w_proj, b_proj, n_head):
    """x: (B, T, C); w_qkv: (C, 3C); b_qkv: (3C,); w_proj: (C, C); b_proj: (C,)."""
    B, T, C = x.shape
    hd = C // n_head
    out_dtype = x.dtype

    # bf16 MXU operands, f32 accumulation; biases stay f32 (added to f32 acc).
    xb = x.astype(jnp.bfloat16).reshape(B * T, C)
    wqkv = w_qkv.astype(jnp.bfloat16)
    wproj = w_proj.astype(jnp.bfloat16)
    bqkv = b_qkv.astype(jnp.float32).reshape(1, 3 * C)
    bproj = b_proj.astype(jnp.float32).reshape(1, C)

    # 1) QKV projection: (B*T, C) @ (C, 3C) + b.
    qkv = _linear(xb, wqkv, bqkv, jnp.bfloat16)                          # (B*T, 3C)

    # 2) Head split (XLA layout plumbing; hd < 128 so a channel-indexed
    #    in-kernel read would not be lane-aligned).
    qkv = qkv.reshape(B, T, 3, n_head, hd).transpose(2, 0, 3, 1, 4)      # (3, B, H, T, hd)
    q = qkv[0].reshape(B * n_head, T, hd)
    k = qkv[1].reshape(B * n_head, T, hd)
    v = qkv[2].reshape(B * n_head, T, hd)

    # 3) Causal flash attention (online softmax, causal DMA + compute skip).
    y = _flash_attention(q, k, v)                                        # (B*H, T, hd)

    # 4) Merge heads (XLA), then output projection.
    y = y.reshape(B, n_head, T, hd).transpose(0, 2, 1, 3).reshape(B * T, C)
    out = _linear(y, wproj, bproj, out_dtype)                            # (B*T, C)
    return out.reshape(B, T, C)


# ----------------------------------------------------------------------------
# reference + test
# ----------------------------------------------------------------------------
def _reference(x, w_qkv, b_qkv, w_proj, b_proj, n_head):
    B, T, C = x.shape
    hd = C // n_head
    qkv = x @ w_qkv + b_qkv
    q, k, v = jnp.split(qkv, 3, axis=2)
    q = q.reshape(B, T, n_head, hd).transpose(0, 2, 1, 3)
    k = k.reshape(B, T, n_head, hd).transpose(0, 2, 1, 3)
    v = v.reshape(B, T, n_head, hd).transpose(0, 2, 1, 3)
    att = jnp.einsum("bhqd,bhkd->bhqk", q, k) / math.sqrt(hd)
    mask = jnp.tril(jnp.ones((T, T), dtype=bool))
    att = jnp.where(mask[None, None], att, -jnp.inf)
    att = jax.nn.softmax(att, axis=-1)
    y = jnp.einsum("bhqk,bhkd->bhqd", att, v)
    y = y.transpose(0, 2, 1, 3).reshape(B, T, C)
    return y @ w_proj + b_proj


if __name__ == "__main__":
    # Small config consistent with the module: n_embd % n_head == 0.
    B, T, C, n_head = 2, 8, 32, 4

    key = jax.random.PRNGKey(0)
    kx, kw1, kb1, kw2, kb2 = jax.random.split(key, 5)

    x = jax.random.normal(kx, (B, T, C), dtype=jnp.float32)

    # Deterministic parameters (Linear weights stored pre-transposed: (in, out)).
    w_qkv = jax.random.normal(kw1, (C, 3 * C), dtype=jnp.float32) * 0.02
    b_qkv = jax.random.normal(kb1, (3 * C,), dtype=jnp.float32) * 0.02
    w_proj = jax.random.normal(kw2, (C, C), dtype=jnp.float32) * 0.02
    b_proj = jax.random.normal(kb2, (C,), dtype=jnp.float32) * 0.02

    out = causal_self_attention(x, w_qkv, b_qkv, w_proj, b_proj, n_head)
    out = jax.block_until_ready(out)

    ref = _reference(x, w_qkv, b_qkv, w_proj, b_proj, n_head)
    # bf16 MXU operands + approx reciprocal => relaxed tolerance vs f32 reference.
    assert jnp.allclose(out, ref, atol=1e-2, rtol=5e-2), "mismatch vs reference"

    print("KERNEL_OK")
</pallas_src>

<mosaic_0001>
module attributes {stable_mosaic.version = 11 : i64} {
  func.func @_linear_kernel(%arg0: i32, %arg1: i32, %arg2: memref<16x32xbf16, #tpu.memory_space<vmem>>, %arg3: memref<32x96xbf16, #tpu.memory_space<vmem>>, %arg4: memref<1x96xf32, #tpu.memory_space<vmem>>, %arg5: memref<16x96xbf16, #tpu.memory_space<vmem>>) attributes {dimension_semantics = [#tpu.dimension_semantics<parallel>, #tpu.dimension_semantics<parallel>], iteration_bounds = array<i64: 1, 1>, scalar_prefetch = 0 : i64, scratch_operands = 0 : i64, tpu.core_type = #tpu.core_type<tc>, window_params = [{transform_indices = @transform_0, window_bounds = array<i64: 16, 32>}, {transform_indices = @transform_1, window_bounds = array<i64: 32, 96>}, {transform_indices = @transform_2, window_bounds = array<i64: 1, 96>}, {transform_indices = @transform_3, window_bounds = array<i64: 16, 96>}]} {
    %c0 = arith.constant 0 : index
    %c0_0 = arith.constant 0 : index
    %0 = vector.load %arg2[%c0, %c0_0] : memref<16x32xbf16, #tpu.memory_space<vmem>>, vector<16x32xbf16>
    %c0_1 = arith.constant 0 : index
    %c0_2 = arith.constant 0 : index
    %1 = vector.load %arg3[%c0_1, %c0_2] : memref<32x96xbf16, #tpu.memory_space<vmem>>, vector<32x96xbf16>
    %cst = arith.constant dense<0.000000e+00> : vector<16x96xf32>
    %2 = tpu.matmul %0, %1, %cst {dimension_numbers = #tpu.dot_dimension_numbers<[1], [0], [0], [1], [0, 0, 1, 1], [], []>} : vector<16x32xbf16>, vector<32x96xbf16>, vector<16x96xf32> -> vector<16x96xf32>
    %c0_3 = arith.constant 0 : index
    %c0_4 = arith.constant 0 : index
    %3 = vector.load %arg4[%c0_3, %c0_4] : memref<1x96xf32, #tpu.memory_space<vmem>>, vector<1x96xf32>
    %4 = vector.broadcast %3 : vector<1x96xf32> to vector<16x96xf32>
    %5 = arith.addf %2, %4 : vector<16x96xf32>
    %6 = arith.truncf %5 : vector<16x96xf32> to vector<16x96xbf16>
    %c0_5 = arith.constant 0 : index
    %c0_6 = arith.constant 0 : index
    %7 = vector.load %arg5[%c0_5, %c0_6] : memref<16x96xbf16, #tpu.memory_space<vmem>>, vector<16x96xbf16>
    tpu.vector_store %arg5[%c0_5, %c0_6], %6 {strides = array<i32>} : memref<16x96xbf16, #tpu.memory_space<vmem>>, vector<16x96xbf16>,
    return
  }
  func.func @transform_0(%arg0: i32, %arg1: i32) -> (i32, i32) {
    %c0_i32 = arith.constant 0 : i32
    %c0_i32_0 = arith.constant 0 : i32
    return %arg0, %c0_i32 : i32, i32
  }
  func.func @transform_1(%arg0: i32, %arg1: i32) -> (i32, i32) {
    %c0_i32 = arith.constant 0 : i32
    %c0_i32_0 = arith.constant 0 : i32
    return %c0_i32, %arg1 : i32, i32
  }
  func.func @transform_2(%arg0: i32, %arg1: i32) -> (i32, i32) {
    %c0_i32 = arith.constant 0 : i32
    %c0_i32_0 = arith.constant 0 : i32
    return %c0_i32, %arg1 : i32, i32
  }
  func.func @transform_3(%arg0: i32, %arg1: i32) -> (i32, i32) {
    %c0_i32 = arith.constant 0 : i32
    return %arg0, %arg1 : i32, i32
  }
}

</mosaic_0001>

<llo_original>
// kernel: tpu_custom_call.1
$region0: #{tpu_custom_call.1}
  #allocation0 [shape = 'u32[]', space=smem, size = 0x4, offset = 0x4, fixed_abs, tag = 'smem constant byte address 0x4 - core index']
  #allocation1 [shape = 'u32[144,128]{1,0:T(1,128)}', space=vmem, size = 0x12000, scoped, tag = 'internal scratch']
  %s0 = inlined_call_operand.hbm [shape: bf16[16,32], index: 0, kind: input, shape index: {}]
  %s1 = inlined_call_operand.hbm [shape: bf16[32,96], index: 1, kind: input, shape index: {}]
  %s2 = inlined_call_operand.vmem [shape: f32[1,96], index: 2, kind: input, shape index: {}]
  %s3 = inlined_call_operand.hbm [shape: bf16[16,96], index: 3, kind: output, shape index: {}]
  %s4 = sld [smem:[#allocation0]]
  $region30: #{tpu_custom_call.1} parent=0
    _
  %s6 = ssub.s32 1, %s4
  %s7 = scalar_select 0, %s6, %s4
  $region1: #{tpu_custom_call.1} parent=0
    #allocation2 [shape = 'u8[4096]{0}', space=vmem, size = 0x1000, scoped, tag = 'input window, operand 0, single buffered']
    #allocation3 [shape = 's32[1]{0}', space=sflag, size = 0x4, scoped, tag = 'scoped memory for tpu_custom_call.1']
    #allocation4 [shape = 's32[1]{0}', space=sflag, size = 0x4, scoped, tag = 'scoped memory for tpu_custom_call.1']
    #allocation5 [shape = 'u8[8192]{0}', space=vmem, size = 0x2000, scoped, tag = 'input window, operand 1, single buffered']
    #allocation6 [shape = 's32[1]{0}', space=sflag, size = 0x4, scoped, tag = 'scoped memory for tpu_custom_call.1']
    #allocation7 [shape = 'u8[4096]{0}', space=vmem, size = 0x1000, scoped, tag = 'output window, operand 0, single buffered']
    %8 = vsyncpa [#allocation3], 0
    %9 = vsyncpa [#allocation6], 0
    %10 = vsyncpa [#allocation4], 0
    // Predicated region
    $region2: #{tpu_custom_call.1} parent=1 // pred_check
      _
    $region3: #{tpu_custom_call.1} parent=1 // pred_check_branch
      %12 = sbr.rel (0) target = $region5
    $region4: #{tpu_custom_call.1} parent=1 // pred_region
      %s14 = ssub.s32 128, 128
      %15 = vsyncadd [#allocation3], %s14
      %s16 = sshll.u32 [#allocation2], 4
      %s17 = int_to_ptr.vmem [resolvable:$true] %s16
      %22 = dma.hbm_to_vmem [thread:$0]  %s0, 128, %s17, [#allocation3], 64, 64, 4
    $region5: #{tpu_custom_call.1} parent=1 // pred_fallthru
      _
    // Predicated region
    $region6: #{tpu_custom_call.1} parent=1 // pred_check
      _
    $region7: #{tpu_custom_call.1} parent=1 // pred_check_branch
      %24 = sbr.rel (0) target = $region9
    $region8: #{tpu_custom_call.1} parent=1 // pred_region
      %s26 = ssub.s32 256, 256
      %27 = vsyncadd [#allocation6], %s26
      %s28 = sshll.u32 [#allocation5], 4
      %s29 = int_to_ptr.vmem [resolvable:$true] %s28
      %34 = dma.hbm_to_vmem [thread:$0]  %s1, 256, %s29, [#allocation6], 64, 64, 4
    $region9: #{tpu_custom_call.1} parent=1 // pred_fallthru
      _
    // Predicated region
    $region10: #{tpu_custom_call.1} parent=1 // pred_check
      _
    $region11: #{tpu_custom_call.1} parent=1 // pred_check_branch
      %36 = sbr.rel (0) target = $region13
    $region12: #{tpu_custom_call.1} parent=1 // pred_region
      _
    $region13: #{tpu_custom_call.1} parent=1 // pred_fallthru
      _
    // Predicated region
    $region14: #{tpu_custom_call.1} parent=1 // pred_check
      _
    $region15: #{tpu_custom_call.1} parent=1 // pred_check_branch
      %38 = sbr.rel (0) target = $region17
    $region16: #{tpu_custom_call.1} parent=1 // pred_region
      %39 = dma.done [#allocation3], 128
    $region17: #{tpu_custom_call.1} parent=1 // pred_fallthru
      _
    // Predicated region
    $region18: #{tpu_custom_call.1} parent=1 // pred_check
      _
    $region19: #{tpu_custom_call.1} parent=1 // pred_check_branch
      %41 = sbr.rel (0) target = $region21
    $region20: #{tpu_custom_call.1} parent=1 // pred_region
      %42 = dma.done [#allocation6], 256
    $region21: #{tpu_custom_call.1} parent=1 // pred_fallthru
      _
    %v44 = vld [vmem:[#allocation2] sm:$0xf]
    %v45 = vld [vmem:[#allocation2 + $0x4] sm:$0xf]
    %v46 = vld [vmem:[#allocation5] sm:$0xf]
    %v47 = vld [vmem:[#allocation5 + $0x4] sm:$0xf]
    %v48 = vld [vmem:[#allocation5 + $0x8] sm:$0xf]
    %v49 = vld [vmem:[#allocation5 + $0xc] sm:$0xf]
    %v50 = vld [vmem:[%s2] sm:$0x1]
    %v52 = vlaneseq
    %v53 = vshrl.u32 %v52, 7
    %v54 = vsub.s32 0, %v53
    %v55 = vrot.slane %v50, %v54
    %v59 = vunpack.c.l.b16 %v44
    %v60 = vunpack.c.l.b16 %v45
    %v61 = vpack.c.b16 %v60, %v59
    %v66 = vunpack.c.l.b16 %v46
    %v67 = vunpack.c.l.b16 %v47
    %v68 = vunpack.c.l.b16 %v48
    %v69 = vunpack.c.l.b16 %v49
    %v70 = vpack.c.b16 %v67, %v66
    %v71 = vpack.c.b16 %v69, %v68
    %vm74 = vcmask 261120
    %v76 = vsel %vm74, %v61, 0
    %78 = vmatprep.subr.bf16.mxu0 0
    %79 = vmatpush1.bf16.msra.mxu0 0
    %80 = vmatprep.subr.bf16.mxu0 0
    %81 = vmatpush1.bf16.msra.mxu0 0
    %82 = vmatprep.subr.bf16.mxu0 0
    %83 = vmatpush1.bf16.msra.mxu0 0
    %84 = vmatprep.subr.bf16.mxu0 0
    %85 = vmatpush1.bf16.msra.mxu0 0
    %86 = vmatprep.subr.bf16.mxu0 0
    %87 = vmatpush1.bf16.msra.mxu0 0
    %88 = vmatprep.subr.bf16.mxu0 0
    %89 = vmatpush1.bf16.msra.mxu0 0
    %90 = vmatprep.subr.bf16.mxu0 0
    %91 = vmatpush1.bf16.msra.mxu0 %v71
    %92 = vmatprep.subr.bf16.mxu0 0
    %93 = vmatpush1.bf16.msra.mxu0 %v70
    %94 = vmatprep.subr.bf16.mxu0 0
    %95 = vmatpush2.bf16.msra.mxu0 0
    %96 = vmatprep.subr.bf16.mxu0 0
    %97 = vmatpush2.bf16.msra.mxu0 0
    %98 = vmatprep.subr.bf16.mxu0 0
    %99 = vmatpush2.bf16.msra.mxu0 0
    %100 = vmatprep.subr.bf16.mxu0 0
    %101 = vmatpush2.bf16.msra.mxu0 0
    %102 = vmatprep.subr.bf16.mxu0 0
    %103 = vmatpush2.bf16.msra.mxu0 0
    %104 = vmatprep.subr.bf16.mxu0 0
    %105 = vmatpush2.bf16.msra.mxu0 0
    %106 = vmatprep.subr.bf16.mxu0 0
    %107 = vmatpush2.bf16.msra.mxu0 0
    %108 = vmatprep.subr.bf16.mxu0 0
    %109 = vmatpush2.bf16.msra.mxu0 0
    %110 = vmatprep.mubr.bf16.mxu0 0
    %111 = vmatmul.mubr.bf16.gmra.mxu0 %v76
    %v112 = vpop.f32.mrf.mxu0
    %v113 = vadd.f32 %v55, %v112
    %v114 = vpop.f32.mrf.mxu0
    %v115 = vpop.f32.mrf.mxu0
    %v116 = vadd.f32 %v55, %v115
    %v117 = vpop.f32.mrf.mxu0
    %118 = vdwg.mxu0
    %v119 = vpack.c.bf16 %v116, %v113
    %v121 = vunpack.c.l.b16 %v119
    %v122 = vunpack.c.h.b16 %v119
    %v123 = vpack.c.b16 %v121, %v121
    %v124 = vpack.c.b16 %v122, %v122
    %vm127 = vcmask 781312
    %128 = vst.msk [vmem:[#allocation7] sm:$0xf] %vm127, %v123
    %129 = vst.msk [vmem:[#allocation7 + $0x4] sm:$0xf] %vm127, %v124
    // Predicated region
    $region22: #{tpu_custom_call.1} parent=1 // pred_check
      _
    $region23: #{tpu_custom_call.1} parent=1 // pred_check_branch
      %131 = sbr.rel (0) target = $region25
    $region24: #{tpu_custom_call.1} parent=1 // pred_region
      %s133 = ssub.s32 128, 128
      %134 = vsyncadd [#allocation4], %s133
      %s135 = sshll.u32 [#allocation7], 4
      %s136 = int_to_ptr.vmem [resolvable:$true] %s135
      %141 = dma.vmem_to_hbm [thread:$0]  %s136, 128, %s3, [#allocation4], 64, 64, 4
    $region25: #{tpu_custom_call.1} parent=1 // pred_fallthru
      _
    // Predicated region
    $region26: #{tpu_custom_call.1} parent=1 // pred_check
      _
    $region27: #{tpu_custom_call.1} parent=1 // pred_check_branch
      %143 = sbr.rel (0) target = $region29
    $region28: #{tpu_custom_call.1} parent=1 // pred_region
      %144 = dma.done [#allocation4], 128
    $region29: #{tpu_custom_call.1} parent=1 // pred_fallthru
      _
    %145 = vsyncpa [#allocation3], 1
    %146 = vsyncpa [#allocation6], 1
    %147 = vsyncpa [#allocation4], 1

</llo_original>
